<compile_context>
chip_gen: v7x
topology: tpu7x:2x2x1
jax: 0.10.0
libtpu: 0.0.40
codegen_flags: <defaults>
</compile_context>

<pallas_src>
import jax
import jax.numpy as jnp
from jax.experimental import pallas as pl
from jax.experimental.pallas import tpu as pltpu  # noqa: F401  (TPU backend)


def _param_identity_kernel(a0_ref, o_ref):
    # forward(input) -> self.a[0]  : pure identity on the parameter tile.
    o_ref[...] = a0_ref[...]


def net_forward(x, a0):
    """Pallas equivalent of Net.forward(input) -> self.a[0].

    `x` is accepted to mirror the PyTorch signature but — exactly like the
    PyTorch forward — is never read, and is NOT passed into the pallas_call,
    so no DMA is generated for it.
    """
    del x  # intentionally unused (matches PyTorch semantics)
    return pl.pallas_call(
        _param_identity_kernel,
        out_shape=jax.ShapeDtypeStruct(a0.shape, a0.dtype),
        # No grid: single invocation, whole-array blocks in VMEM.
    )(a0)


def init_params():
    """Deterministic parameter/buffer init matching Net.__init__."""
    # self.a = nn.ParameterList([nn.Parameter(torch.zeros(3, 4))])
    a0 = jnp.zeros((3, 4), dtype=jnp.float32)
    # Registered buffers (unused in forward, kept for fidelity):
    b0 = jnp.ones((2, 3), dtype=jnp.float32)
    b1 = jnp.ones((2, 3), dtype=jnp.float32)
    return a0, (b0, b1)


if __name__ == "__main__":
    key = jax.random.PRNGKey(0)
    # Dummy input (ignored by forward), NCHW-like small shape.
    x = jax.random.normal(key, (2, 4, 16, 16), dtype=jnp.float32)

    a0, _buffers = init_params()

    out = net_forward(x, a0)
    out = jax.block_until_ready(out)

    # Reference check: forward returns the (3, 4) zero parameter exactly.
    expected = a0
    assert out.shape == (3, 4), out.shape
    assert out.dtype == jnp.float32, out.dtype
    assert jnp.array_equal(out, expected), "output mismatch vs reference"

    print("KERNEL_OK")
</pallas_src>

<mosaic_0001>
module attributes {stable_mosaic.version = 11 : i64} {
  func.func @_param_identity_kernel(%arg0: memref<3x4xf32, #tpu.memory_space<vmem>>, %arg1: memref<3x4xf32, #tpu.memory_space<vmem>>) attributes {dimension_semantics = [], scalar_prefetch = 0 : i64, scratch_operands = 0 : i64, tpu.core_type = #tpu.core_type<tc>} {
    %c0 = arith.constant 0 : index
    %c0_0 = arith.constant 0 : index
    %0 = vector.load %arg0[%c0, %c0_0] : memref<3x4xf32, #tpu.memory_space<vmem>>, vector<3x4xf32>
    %c0_1 = arith.constant 0 : index
    %c0_2 = arith.constant 0 : index
    %1 = vector.load %arg1[%c0_1, %c0_2] : memref<3x4xf32, #tpu.memory_space<vmem>>, vector<3x4xf32>
    tpu.vector_store %arg1[%c0_1, %c0_2], %0 {strides = array<i32>} : memref<3x4xf32, #tpu.memory_space<vmem>>, vector<3x4xf32>,
    return
  }
}

</mosaic_0001>

<llo_original>
// kernel: tpu_custom_call.1
$region0: #{tpu_custom_call.1}
  #allocation0 [shape = 'u32[]', space=smem, size = 0x4, offset = 0x4, fixed_abs, tag = 'smem constant byte address 0x4 - core index']
  #allocation1 [shape = 'u32[144,128]{1,0:T(1,128)}', space=vmem, size = 0x12000, scoped, tag = 'internal scratch']
  %s0 = inlined_call_operand.hbm [shape: f32[3,4], index: 0, kind: input, shape index: {}]
  %s1 = inlined_call_operand.hbm [shape: f32[3,4], index: 1, kind: output, shape index: {}]
  %s2 = sld [smem:[#allocation0]]
  $region18: #{tpu_custom_call.1} parent=0
    _
  %s4 = ssub.s32 1, %s2
  %s5 = scalar_select 0, %s4, %s2
  $region1: #{tpu_custom_call.1} parent=0
    #allocation2 [shape = 'u8[2048]{0}', space=vmem, size = 0x800, scoped, tag = 'input window, operand 0, single buffered']
    #allocation3 [shape = 's32[1]{0}', space=sflag, size = 0x4, scoped, tag = 'scoped memory for tpu_custom_call.1']
    #allocation4 [shape = 's32[1]{0}', space=sflag, size = 0x4, scoped, tag = 'scoped memory for tpu_custom_call.1']
    #allocation5 [shape = 'u8[2048]{0}', space=vmem, size = 0x800, scoped, tag = 'output window, operand 0, single buffered']
    %6 = vsyncpa [#allocation3], 0
    %7 = vsyncpa [#allocation4], 0
    // Predicated region
    $region2: #{tpu_custom_call.1} parent=1 // pred_check
      _
    $region3: #{tpu_custom_call.1} parent=1 // pred_check_branch
      %9 = sbr.rel (0) target = $region5
    $region4: #{tpu_custom_call.1} parent=1 // pred_region
      %s11 = ssub.s32 64, 64
      %12 = vsyncadd [#allocation3], %s11
      %s14 = sshll.u32 [#allocation2], 4
      %s15 = int_to_ptr.vmem [resolvable:$true] %s14
      %17 = dma.hbm_to_vmem [thread:$0]  %s0, 64, %s15, [#allocation3]
    $region5: #{tpu_custom_call.1} parent=1 // pred_fallthru
      _
    // Predicated region
    $region6: #{tpu_custom_call.1} parent=1 // pred_check
      _
    $region7: #{tpu_custom_call.1} parent=1 // pred_check_branch
      %19 = sbr.rel (0) target = $region9
    $region8: #{tpu_custom_call.1} parent=1 // pred_region
      %20 = dma.done [#allocation3], 64
    $region9: #{tpu_custom_call.1} parent=1 // pred_fallthru
      _
    %v21 = vld [vmem:[#allocation2] sm:$0x7]
    %vm22 = vcmask 26624
    %23 = vst.msk [vmem:[#allocation5] sm:$0x7] %vm22, %v21
    // Predicated region
    $region10: #{tpu_custom_call.1} parent=1 // pred_check
      _
    $region11: #{tpu_custom_call.1} parent=1 // pred_check_branch
      %25 = sbr.rel (0) target = $region13
    $region12: #{tpu_custom_call.1} parent=1 // pred_region
      %s27 = ssub.s32 64, 64
      %28 = vsyncadd [#allocation4], %s27
      %s30 = sshll.u32 [#allocation5], 4
      %s31 = int_to_ptr.vmem [resolvable:$true] %s30
      %33 = dma.vmem_to_hbm [thread:$0]  %s31, 64, %s1, [#allocation4]
    $region13: #{tpu_custom_call.1} parent=1 // pred_fallthru
      _
    // Predicated region
    $region14: #{tpu_custom_call.1} parent=1 // pred_check
      _
    $region15: #{tpu_custom_call.1} parent=1 // pred_check_branch
      %35 = sbr.rel (0) target = $region17
    $region16: #{tpu_custom_call.1} parent=1 // pred_region
      %36 = dma.done [#allocation4], 64
    $region17: #{tpu_custom_call.1} parent=1 // pred_fallthru
      _
    %37 = vsyncpa [#allocation3], 1
    %38 = vsyncpa [#allocation4], 1

</llo_original>
